<compile_context>
chip_gen: v7x
topology: tpu7x:2x2x1
jax: 0.10.0
libtpu: 0.0.40
codegen_flags: <defaults>
</compile_context>

<pallas_src>
import jax
import jax.numpy as jnp
from jax.experimental import pallas as pl
from jax.experimental.pallas import tpu as pltpu

LANE = 128


def _round_up(x, m):
    return ((x + m - 1) // m) * m


# ----------------------------------------------------------------------------
# Single fused kernel: author_lin -> SAGE1 + ReLU -> SAGE2 -> edge dot product
# ----------------------------------------------------------------------------
def _fused_forward_kernel(
    x_ref,    # (NP, FP)    bf16  padded literal features
    a_ref,    # (NP, NP)    bf16  row-normalized (mean-agg) adjacency
    aw_ref,   # (FP, HP)    bf16  author_lin weight (zero padded)
    ab_ref,   # (1,  HP)    f32   author_lin bias
    w1_ref,   # (2HP, HP)   bf16  SAGE1 merged [w_l ; w_r]
    b1_ref,   # (1,  HP)    f32   SAGE1 bias (lin_l)
    w2_ref,   # (2HP, HP)   bf16  SAGE2 merged [w_l ; w_r]
    b2_ref,   # (1,  HP)    f32   SAGE2 bias (lin_l)
    s_ref,    # (EP, NP)    bf16  one-hot rows selecting edge endpoint 1
    d_ref,    # (EP, NP)    bf16  one-hot rows selecting edge endpoint 2
    o_ref,    # (1,  EP)    f32   lane-major edge scores
):
    a = a_ref[...]

    # author_lin: h = x @ W + b
    h = jnp.dot(x_ref[...], aw_ref[...], preferred_element_type=jnp.float32)
    h = (h + ab_ref[...]).astype(jnp.bfloat16)

    # SAGEConv 1 (mean aggregation) + ReLU
    #   out = [a_norm @ h, h] @ [w_l ; w_r] + b
    agg = jnp.dot(a, h, preferred_element_type=jnp.float32).astype(jnp.bfloat16)
    cat = jnp.concatenate([agg, h], axis=-1)
    h = jnp.dot(cat, w1_ref[...], preferred_element_type=jnp.float32) + b1_ref[...]
    h = jnp.maximum(h, 0.0).astype(jnp.bfloat16)

    # SAGEConv 2
    agg = jnp.dot(a, h, preferred_element_type=jnp.float32).astype(jnp.bfloat16)
    cat = jnp.concatenate([agg, h], axis=-1)
    h = jnp.dot(cat, w2_ref[...], preferred_element_type=jnp.float32) + b2_ref[...]
    h = h.astype(jnp.bfloat16)

    # Classifier: gather both endpoints of every label edge with one-hot MXU
    # matmuls (single step, no per-edge grid), then per-edge dot product.
    x1 = jnp.dot(s_ref[...], h, preferred_element_type=jnp.float32)  # (EP, HP)
    x2 = jnp.dot(d_ref[...], h, preferred_element_type=jnp.float32)  # (EP, HP)
    prod_t = jnp.transpose(x1 * x2)                                  # (HP, EP)
    o_ref[...] = jnp.sum(prod_t, axis=0, keepdims=True)              # (1, EP)


# ----------------------------------------------------------------------------
# Graph / parameter preparation (host-side glue, not the hot path)
# ----------------------------------------------------------------------------
def build_norm_adjacency(edge_index, num_nodes):
    # T.ToUndirected() symmetrizes (and coalesces duplicate edges); mean
    # aggregation -> row-normalize by in-degree.
    src, dst = edge_index[0], edge_index[1]
    src_u = jnp.concatenate([src, dst])
    dst_u = jnp.concatenate([dst, src])
    adj = jnp.zeros((num_nodes, num_nodes), jnp.float32)
    adj = adj.at[dst_u, src_u].set(1.0)  # messages flow src -> dst
    deg = adj.sum(axis=1, keepdims=True)
    return adj / jnp.maximum(deg, 1.0)


def init_params(key, in_feat, hidden):
    # Linear(132, hidden) + two SAGEConv(hidden, hidden):
    #   lin_l (with bias) on aggregated neighbors, lin_r (no bias) on the root.
    ks = jax.random.split(key, 5)

    def g(k, fi, fo):
        return jax.random.normal(k, (fi, fo), jnp.float32) / jnp.sqrt(fi)

    return {
        "author_w": g(ks[0], in_feat, hidden),
        "author_b": jnp.zeros((hidden,), jnp.float32),
        "c1_wl": g(ks[1], hidden, hidden),
        "c1_wr": g(ks[2], hidden, hidden),
        "c1_b": jnp.zeros((hidden,), jnp.float32),
        "c2_wl": g(ks[3], hidden, hidden),
        "c2_wr": g(ks[4], hidden, hidden),
        "c2_b": jnp.zeros((hidden,), jnp.float32),
    }


def pack_params(params):
    """Zero-pad to 128-lane multiples, merge lin_l/lin_r, cast weights to bf16."""
    in_feat, hidden = params["author_w"].shape
    fp = _round_up(in_feat, LANE)
    hp = _round_up(hidden, LANE)

    aw = jnp.zeros((fp, hp), jnp.float32).at[:in_feat, :hidden].set(params["author_w"])
    ab = jnp.zeros((1, hp), jnp.float32).at[0, :hidden].set(params["author_b"])

    def merge(wl, wr, b):
        w = jnp.zeros((2 * hp, hp), jnp.float32)
        w = w.at[:hidden, :hidden].set(wl)            # rows for aggregated neighbors
        w = w.at[hp:hp + hidden, :hidden].set(wr)     # rows for the root node
        bb = jnp.zeros((1, hp), jnp.float32).at[0, :hidden].set(b)
        return w.astype(jnp.bfloat16), bb

    w1, b1 = merge(params["c1_wl"], params["c1_wr"], params["c1_b"])
    w2, b2 = merge(params["c2_wl"], params["c2_wr"], params["c2_b"])
    return {
        "aw": aw.astype(jnp.bfloat16), "ab": ab,
        "w1": w1, "b1": b1,
        "w2": w2, "b2": b2,
    }


# ----------------------------------------------------------------------------
# Model forward = one fused pallas_call
# ----------------------------------------------------------------------------
def model_forward(packed, x, a_norm, edge_label_index):
    n, in_feat = x.shape
    e = edge_label_index.shape[1]
    fp, hp = packed["aw"].shape
    npad = _round_up(n, LANE)
    epad = _round_up(e, LANE)

    # Pad + cast once in the wrapper (not per kernel op).
    xp = jnp.zeros((npad, fp), jnp.float32).at[:n, :in_feat].set(x).astype(jnp.bfloat16)
    ap = jnp.zeros((npad, npad), jnp.float32).at[:n, :n].set(a_norm).astype(jnp.bfloat16)

    src = edge_label_index[0].astype(jnp.int32)
    dst = edge_label_index[1].astype(jnp.int32)
    rows = jnp.arange(e)
    s_oh = jnp.zeros((epad, npad), jnp.bfloat16).at[rows, src].set(1.0)
    d_oh = jnp.zeros((epad, npad), jnp.bfloat16).at[rows, dst].set(1.0)

    out = pl.pallas_call(
        _fused_forward_kernel,
        out_shape=jax.ShapeDtypeStruct((1, epad), jnp.float32),
        in_specs=[pl.BlockSpec(memory_space=pltpu.MemorySpace.VMEM)] * 10,
        out_specs=pl.BlockSpec(memory_space=pltpu.MemorySpace.VMEM),
    )(xp, ap, packed["aw"], packed["ab"], packed["w1"], packed["b1"],
      packed["w2"], packed["b2"], s_oh, d_oh)

    return out[0, :e]
    # TODO(synk): for graphs with N >> a few thousand nodes, tile a_norm with a
    # k-reduction grid axis (and a "parallel" row axis for v7x's 2 TCs) instead
    # of the whole-array VMEM residency used here.


if __name__ == "__main__":
    N = 64            # author nodes
    IN_FEAT = 132     # raw literal feature dim (author_lin input)
    HIDDEN = 32       # in_channels == hidden_channels
    NUM_EDGES = 200
    NUM_LABEL_EDGES = 16

    key = jax.random.PRNGKey(0)
    k_x, k_e, k_l, k_p = jax.random.split(key, 4)

    x = jax.random.normal(k_x, (N, IN_FEAT), jnp.float32)
    edge_index = jax.random.randint(k_e, (2, NUM_EDGES), 0, N, jnp.int32)
    edge_label_index = jax.random.randint(k_l, (2, NUM_LABEL_EDGES), 0, N, jnp.int32)

    a_norm = build_norm_adjacency(edge_index, N)
    params = init_params(k_p, IN_FEAT, HIDDEN)
    packed = pack_params(params)

    fwd = jax.jit(model_forward)
    pred = fwd(packed, x, a_norm, edge_label_index)
    jax.block_until_ready(pred)
    assert pred.shape == (NUM_LABEL_EDGES,)
    print("KERNEL_OK")
</pallas_src>

<mosaic_0001>
module attributes {stable_mosaic.version = 11 : i64} {
  func.func @_fused_forward_kernel(%arg0: memref<128x256xbf16, #tpu.memory_space<vmem>>, %arg1: memref<128x128xbf16, #tpu.memory_space<vmem>>, %arg2: memref<256x128xbf16, #tpu.memory_space<vmem>>, %arg3: memref<1x128xf32, #tpu.memory_space<vmem>>, %arg4: memref<256x128xbf16, #tpu.memory_space<vmem>>, %arg5: memref<1x128xf32, #tpu.memory_space<vmem>>, %arg6: memref<256x128xbf16, #tpu.memory_space<vmem>>, %arg7: memref<1x128xf32, #tpu.memory_space<vmem>>, %arg8: memref<128x128xbf16, #tpu.memory_space<vmem>>, %arg9: memref<128x128xbf16, #tpu.memory_space<vmem>>, %arg10: memref<1x128xf32, #tpu.memory_space<vmem>>) attributes {dimension_semantics = [], scalar_prefetch = 0 : i64, scratch_operands = 0 : i64, tpu.core_type = #tpu.core_type<tc>} {
    %c0 = arith.constant 0 : index
    %c0_0 = arith.constant 0 : index
    %0 = vector.load %arg1[%c0, %c0_0] : memref<128x128xbf16, #tpu.memory_space<vmem>>, vector<128x128xbf16>
    %c0_1 = arith.constant 0 : index
    %c0_2 = arith.constant 0 : index
    %1 = vector.load %arg0[%c0_1, %c0_2] : memref<128x256xbf16, #tpu.memory_space<vmem>>, vector<128x256xbf16>
    %c0_3 = arith.constant 0 : index
    %c0_4 = arith.constant 0 : index
    %2 = vector.load %arg2[%c0_3, %c0_4] : memref<256x128xbf16, #tpu.memory_space<vmem>>, vector<256x128xbf16>
    %cst = arith.constant dense<0.000000e+00> : vector<128x128xf32>
    %3 = tpu.matmul %1, %2, %cst {dimension_numbers = #tpu.dot_dimension_numbers<[1], [0], [0], [1], [0, 0, 1, 1], [], []>} : vector<128x256xbf16>, vector<256x128xbf16>, vector<128x128xf32> -> vector<128x128xf32>
    %c0_5 = arith.constant 0 : index
    %c0_6 = arith.constant 0 : index
    %4 = vector.load %arg3[%c0_5, %c0_6] : memref<1x128xf32, #tpu.memory_space<vmem>>, vector<1x128xf32>
    %5 = vector.broadcast %4 : vector<1x128xf32> to vector<128x128xf32>
    %6 = arith.addf %3, %5 : vector<128x128xf32>
    %7 = arith.truncf %6 : vector<128x128xf32> to vector<128x128xbf16>
    %cst_7 = arith.constant dense<0.000000e+00> : vector<128x128xf32>
    %8 = tpu.matmul %0, %7, %cst_7 {dimension_numbers = #tpu.dot_dimension_numbers<[1], [0], [0], [1], [0, 0, 1, 1], [], []>} : vector<128x128xbf16>, vector<128x128xbf16>, vector<128x128xf32> -> vector<128x128xf32>
    %9 = arith.truncf %8 : vector<128x128xf32> to vector<128x128xbf16>
    %10 = tpu.concatenate %9, %7 in 1 : vector<128x128xbf16>, vector<128x128xbf16> -> vector<128x256xbf16>
    %c0_8 = arith.constant 0 : index
    %c0_9 = arith.constant 0 : index
    %11 = vector.load %arg4[%c0_8, %c0_9] : memref<256x128xbf16, #tpu.memory_space<vmem>>, vector<256x128xbf16>
    %cst_10 = arith.constant dense<0.000000e+00> : vector<128x128xf32>
    %12 = tpu.matmul %10, %11, %cst_10 {dimension_numbers = #tpu.dot_dimension_numbers<[1], [0], [0], [1], [0, 0, 1, 1], [], []>} : vector<128x256xbf16>, vector<256x128xbf16>, vector<128x128xf32> -> vector<128x128xf32>
    %c0_11 = arith.constant 0 : index
    %c0_12 = arith.constant 0 : index
    %13 = vector.load %arg5[%c0_11, %c0_12] : memref<1x128xf32, #tpu.memory_space<vmem>>, vector<1x128xf32>
    %14 = vector.broadcast %13 : vector<1x128xf32> to vector<128x128xf32>
    %15 = arith.addf %12, %14 : vector<128x128xf32>
    %cst_13 = arith.constant 0.000000e+00 : f32
    %16 = vector.broadcast %cst_13 : f32 to vector<128x128xf32>
    %17 = arith.maximumf %15, %16 : vector<128x128xf32>
    %18 = arith.truncf %17 : vector<128x128xf32> to vector<128x128xbf16>
    %cst_14 = arith.constant dense<0.000000e+00> : vector<128x128xf32>
    %19 = tpu.matmul %0, %18, %cst_14 {dimension_numbers = #tpu.dot_dimension_numbers<[1], [0], [0], [1], [0, 0, 1, 1], [], []>} : vector<128x128xbf16>, vector<128x128xbf16>, vector<128x128xf32> -> vector<128x128xf32>
    %20 = arith.truncf %19 : vector<128x128xf32> to vector<128x128xbf16>
    %21 = tpu.concatenate %20, %18 in 1 : vector<128x128xbf16>, vector<128x128xbf16> -> vector<128x256xbf16>
    %c0_15 = arith.constant 0 : index
    %c0_16 = arith.constant 0 : index
    %22 = vector.load %arg6[%c0_15, %c0_16] : memref<256x128xbf16, #tpu.memory_space<vmem>>, vector<256x128xbf16>
    %cst_17 = arith.constant dense<0.000000e+00> : vector<128x128xf32>
    %23 = tpu.matmul %21, %22, %cst_17 {dimension_numbers = #tpu.dot_dimension_numbers<[1], [0], [0], [1], [0, 0, 1, 1], [], []>} : vector<128x256xbf16>, vector<256x128xbf16>, vector<128x128xf32> -> vector<128x128xf32>
    %c0_18 = arith.constant 0 : index
    %c0_19 = arith.constant 0 : index
    %24 = vector.load %arg7[%c0_18, %c0_19] : memref<1x128xf32, #tpu.memory_space<vmem>>, vector<1x128xf32>
    %25 = vector.broadcast %24 : vector<1x128xf32> to vector<128x128xf32>
    %26 = arith.addf %23, %25 : vector<128x128xf32>
    %27 = arith.truncf %26 : vector<128x128xf32> to vector<128x128xbf16>
    %c0_20 = arith.constant 0 : index
    %c0_21 = arith.constant 0 : index
    %28 = vector.load %arg8[%c0_20, %c0_21] : memref<128x128xbf16, #tpu.memory_space<vmem>>, vector<128x128xbf16>
    %cst_22 = arith.constant dense<0.000000e+00> : vector<128x128xf32>
    %29 = tpu.matmul %28, %27, %cst_22 {dimension_numbers = #tpu.dot_dimension_numbers<[1], [0], [0], [1], [0, 0, 1, 1], [], []>} : vector<128x128xbf16>, vector<128x128xbf16>, vector<128x128xf32> -> vector<128x128xf32>
    %c0_23 = arith.constant 0 : index
    %c0_24 = arith.constant 0 : index
    %30 = vector.load %arg9[%c0_23, %c0_24] : memref<128x128xbf16, #tpu.memory_space<vmem>>, vector<128x128xbf16>
    %cst_25 = arith.constant dense<0.000000e+00> : vector<128x128xf32>
    %31 = tpu.matmul %30, %27, %cst_25 {dimension_numbers = #tpu.dot_dimension_numbers<[1], [0], [0], [1], [0, 0, 1, 1], [], []>} : vector<128x128xbf16>, vector<128x128xbf16>, vector<128x128xf32> -> vector<128x128xf32>
    %32 = arith.mulf %29, %31 : vector<128x128xf32>
    %33 = tpu.transpose %32, [1, 0] : vector<128x128xf32> -> vector<128x128xf32>
    %cst_26 = arith.constant dense<0.000000e+00> : vector<128xf32>
    %34 = vector.multi_reduction <add>, %33, %cst_26 [0] : vector<128x128xf32> to vector<128xf32>
    %35 = vector.shape_cast %34 : vector<128xf32> to vector<1x128xf32>
    %c0_27 = arith.constant 0 : index
    %c0_28 = arith.constant 0 : index
    %36 = vector.load %arg10[%c0_27, %c0_28] : memref<1x128xf32, #tpu.memory_space<vmem>>, vector<1x128xf32>
    tpu.vector_store %arg10[%c0_27, %c0_28], %35 {strides = array<i32>} : memref<1x128xf32, #tpu.memory_space<vmem>>, vector<1x128xf32>,
    return
  }
}

</mosaic_0001>

<llo_original>
// kernel: model_forward.1
$region0: #{model_forward.1}
  #allocation0 [shape = 'u32[]', space=smem, size = 0x4, offset = 0x4, fixed_abs, tag = 'smem constant byte address 0x4 - core index']
  #allocation1 [shape = 'u32[144,128]{1,0:T(1,128)}', space=vmem, size = 0x12000, scoped, tag = 'internal scratch']
  %s0 = inlined_call_operand.vmem [shape: bf16[128,256], index: 0, kind: input, shape index: {}]
  %s1 = inlined_call_operand.vmem [shape: bf16[128,128], index: 1, kind: input, shape index: {}]
  %s2 = inlined_call_operand.vmem [shape: bf16[256,128], index: 2, kind: input, shape index: {}]
  %s3 = inlined_call_operand.vmem [shape: f32[1,128], index: 3, kind: input, shape index: {}]
  %s4 = inlined_call_operand.vmem [shape: bf16[256,128], index: 4, kind: input, shape index: {}]
  %s5 = inlined_call_operand.vmem [shape: f32[1,128], index: 5, kind: input, shape index: {}]
  %s6 = inlined_call_operand.vmem [shape: bf16[256,128], index: 6, kind: input, shape index: {}]
  %s7 = inlined_call_operand.vmem [shape: f32[1,128], index: 7, kind: input, shape index: {}]
  %s8 = inlined_call_operand.vmem [shape: bf16[128,128], index: 8, kind: input, shape index: {}]
  %s9 = inlined_call_operand.vmem [shape: bf16[128,128], index: 9, kind: input, shape index: {}]
  %s10 = inlined_call_operand.vmem [shape: f32[1,128], index: 10, kind: output, shape index: {}]
  %s11 = sld [smem:[#allocation0]]
  $region50: #{model_forward.1} parent=0
    _
  %s13 = ssub.s32 1, %s11
  %s14 = scalar_select 0, %s13, %s11
  // Predicated region
  $region2: #{model_forward.1} parent=0 // pred_check
    _
  $region3: #{model_forward.1} parent=0 // pred_check_branch
    %16 = sbr.rel (0) target = $region5
  $region4: #{model_forward.1} parent=0 // pred_region
    _
  $region5: #{model_forward.1} parent=0 // pred_fallthru
    _
  // Predicated region
  $region6: #{model_forward.1} parent=0 // pred_check
    _
  $region7: #{model_forward.1} parent=0 // pred_check_branch
    %18 = sbr.rel (0) target = $region9
  $region8: #{model_forward.1} parent=0 // pred_region
    _
  $region9: #{model_forward.1} parent=0 // pred_fallthru
    _
  // Predicated region
  $region10: #{model_forward.1} parent=0 // pred_check
    _
  $region11: #{model_forward.1} parent=0 // pred_check_branch
    %20 = sbr.rel (0) target = $region13
  $region12: #{model_forward.1} parent=0 // pred_region
    _
  $region13: #{model_forward.1} parent=0 // pred_fallthru
    _
  // Predicated region
  $region14: #{model_forward.1} parent=0 // pred_check
    _
  $region15: #{model_forward.1} parent=0 // pred_check_branch
    %22 = sbr.rel (0) target = $region17
  $region16: #{model_forward.1} parent=0 // pred_region
    _
  $region17: #{model_forward.1} parent=0 // pred_fallthru
    _
  // Predicated region
  $region18: #{model_forward.1} parent=0 // pred_check
    _
  $region19: #{model_forward.1} parent=0 // pred_check_branch
    %24 = sbr.rel (0) target = $region21
  $region20: #{model_forward.1} parent=0 // pred_region
    _
  $region21: #{model_forward.1} parent=0 // pred_fallthru
    _
  // Predicated region
  $region22: #{model_forward.1} parent=0 // pred_check
    _
  $region23: #{model_forward.1} parent=0 // pred_check_branch
    %26 = sbr.rel (0) target = $region25
  $region24: #{model_forward.1} parent=0 // pred_region
    _
  $region25: #{model_forward.1} parent=0 // pred_fallthru
    _
  // Predicated region
  $region26: #{model_forward.1} parent=0 // pred_check
    _
  $region27: #{model_forward.1} parent=0 // pred_check_branch
    %28 = sbr.rel (0) target = $region29
  $region28: #{model_forward.1} parent=0 // pred_region
    _
  $region29: #{model_forward.1} parent=0 // pred_fallthru
    _
  // Predicated region
  $region30: #{model_forward.1} parent=0 // pred_check
    _
  $region31: #{model_forward.1} parent=0 // pred_check_branch
    %30 = sbr.rel (0) target = $region33
  $region32: #{model_forward.1} parent=0 // pred_region
    _
  $region33: #{model_forward.1} parent=0 // pred_fallthru
    _
  // Predicated region
  $region34: #{model_forward.1} parent=0 // pred_check
    _
  $region35: #{model_forward.1} parent=0 // pred_check_branch
    %32 = sbr.rel (0) target = $region37
  $region36: #{model_forward.1} parent=0 // pred_region
    _
  $region37: #{model_forward.1} parent=0 // pred_fallthru
    _
  // Predicated region
  $region38: #{model_forward.1} parent=0 // pred_check
    _
  $region39: #{model_forward.1} parent=0 // pred_check_branch
    %34 = sbr.rel (0) target = $region41
  $region40: #{model_forward.1} parent=0 // pred_region
    _
  $region41: #{model_forward.1} parent=0 // pred_fallthru
    _
  %v36 = vld [vmem:[%s1] sm:$0xf]
  %v37 = vld [vmem:[%s1 + $0x4] sm:$0xf]
  %v38 = vld [vmem:[%s1 + $0x8] sm:$0xf]
  %v39 = vld [vmem:[%s1 + $0xc] sm:$0xf]
  %v40 = vld [vmem:[%s1 + $0x10] sm:$0xf]
  %v41 = vld [vmem:[%s1 + $0x14] sm:$0xf]
  %v42 = vld [vmem:[%s1 + $0x18] sm:$0xf]
  %v43 = vld [vmem:[%s1 + $0x1c] sm:$0xf]
  %v44 = vld [vmem:[%s1 + $0x20] sm:$0xf]
  %v45 = vld [vmem:[%s1 + $0x24] sm:$0xf]
  %v46 = vld [vmem:[%s1 + $0x28] sm:$0xf]
  %v47 = vld [vmem:[%s1 + $0x2c] sm:$0xf]
  %v48 = vld [vmem:[%s1 + $0x30] sm:$0xf]
  %v49 = vld [vmem:[%s1 + $0x34] sm:$0xf]
  %v50 = vld [vmem:[%s1 + $0x38] sm:$0xf]
  %v51 = vld [vmem:[%s1 + $0x3c] sm:$0xf]
  %v52 = vld [vmem:[%s0] sm:$0xff]
  %v53 = vld [vmem:[%s0 + $0x8] sm:$0xff]
  %v54 = vld [vmem:[%s0 + $0x10] sm:$0xff]
  %v55 = vld [vmem:[%s0 + $0x18] sm:$0xff]
  %v56 = vld [vmem:[%s0 + $0x20] sm:$0xff]
  %v57 = vld [vmem:[%s0 + $0x28] sm:$0xff]
  %v58 = vld [vmem:[%s0 + $0x30] sm:$0xff]
  %v59 = vld [vmem:[%s0 + $0x38] sm:$0xff]
  %v60 = vld [vmem:[%s0 + $0x40] sm:$0xff]
  %v61 = vld [vmem:[%s0 + $0x48] sm:$0xff]
  %v62 = vld [vmem:[%s0 + $0x50] sm:$0xff]
  %v63 = vld [vmem:[%s0 + $0x58] sm:$0xff]
  %v64 = vld [vmem:[%s0 + $0x60] sm:$0xff]
  %v65 = vld [vmem:[%s0 + $0x68] sm:$0xff]
  %v66 = vld [vmem:[%s0 + $0x70] sm:$0xff]
  %v67 = vld [vmem:[%s0 + $0x78] sm:$0xff]
  %v68 = vld [vmem:[%s2] sm:$0xf]
  %v69 = vld [vmem:[%s2 + $0x4] sm:$0xf]
  %v70 = vld [vmem:[%s2 + $0x8] sm:$0xf]
  %v71 = vld [vmem:[%s2 + $0xc] sm:$0xf]
  %v72 = vld [vmem:[%s2 + $0x10] sm:$0xf]
  %v73 = vld [vmem:[%s2 + $0x14] sm:$0xf]
  %v74 = vld [vmem:[%s2 + $0x18] sm:$0xf]
  %v75 = vld [vmem:[%s2 + $0x1c] sm:$0xf]
  %v76 = vld [vmem:[%s2 + $0x20] sm:$0xf]
  %v77 = vld [vmem:[%s2 + $0x24] sm:$0xf]
  %v78 = vld [vmem:[%s2 + $0x28] sm:$0xf]
  %v79 = vld [vmem:[%s2 + $0x2c] sm:$0xf]
  %v80 = vld [vmem:[%s2 + $0x30] sm:$0xf]
  %v81 = vld [vmem:[%s2 + $0x34] sm:$0xf]
  %v82 = vld [vmem:[%s2 + $0x38] sm:$0xf]
  %v83 = vld [vmem:[%s2 + $0x3c] sm:$0xf]
  %v84 = vld [vmem:[%s2 + $0x40] sm:$0xf]
  %v85 = vld [vmem:[%s2 + $0x44] sm:$0xf]
  %v86 = vld [vmem:[%s2 + $0x48] sm:$0xf]
  %v87 = vld [vmem:[%s2 + $0x4c] sm:$0xf]
  %v88 = vld [vmem:[%s2 + $0x50] sm:$0xf]
  %v89 = vld [vmem:[%s2 + $0x54] sm:$0xf]
  %v90 = vld [vmem:[%s2 + $0x58] sm:$0xf]
  %v91 = vld [vmem:[%s2 + $0x5c] sm:$0xf]
  %v92 = vld [vmem:[%s2 + $0x60] sm:$0xf]
  %v93 = vld [vmem:[%s2 + $0x64] sm:$0xf]
  %v94 = vld [vmem:[%s2 + $0x68] sm:$0xf]
  %v95 = vld [vmem:[%s2 + $0x6c] sm:$0xf]
  %v96 = vld [vmem:[%s2 + $0x70] sm:$0xf]
  %v97 = vld [vmem:[%s2 + $0x74] sm:$0xf]
  %v98 = vld [vmem:[%s2 + $0x78] sm:$0xf]
  %v99 = vld [vmem:[%s2 + $0x7c] sm:$0xf]
  %v100 = vld [vmem:[%s3] sm:$0x1]
  %v102 = vlaneseq
  %v103 = vshrl.u32 %v102, 7
  %v104 = vsub.s32 0, %v103
  %v105 = vrot.slane %v100, %v104
  %v123 = vunpack.c.l.b16 %v52
  %v124 = vunpack.c.h.b16 %v52
  %v125 = vunpack.c.l.b16 %v53
  %v126 = vunpack.c.h.b16 %v53
  %v127 = vunpack.c.l.b16 %v54
  %v128 = vunpack.c.h.b16 %v54
  %v129 = vunpack.c.l.b16 %v55
  %v130 = vunpack.c.h.b16 %v55
  %v131 = vunpack.c.l.b16 %v56
  %v132 = vunpack.c.h.b16 %v56
  %v133 = vunpack.c.l.b16 %v57
  %v134 = vunpack.c.h.b16 %v57
  %v135 = vunpack.c.l.b16 %v58
  %v136 = vunpack.c.h.b16 %v58
  %v137 = vunpack.c.l.b16 %v59
  %v138 = vunpack.c.h.b16 %v59
  %v139 = vunpack.c.l.b16 %v60
  %v140 = vunpack.c.h.b16 %v60
  %v141 = vunpack.c.l.b16 %v61
  %v142 = vunpack.c.h.b16 %v61
  %v143 = vunpack.c.l.b16 %v62
  %v144 = vunpack.c.h.b16 %v62
  %v145 = vunpack.c.l.b16 %v63
  %v146 = vunpack.c.h.b16 %v63
  %v147 = vunpack.c.l.b16 %v64
  %v148 = vunpack.c.h.b16 %v64
  %v149 = vunpack.c.l.b16 %v65
  %v150 = vunpack.c.h.b16 %v65
  %v151 = vunpack.c.l.b16 %v66
  %v152 = vunpack.c.h.b16 %v66
  %v153 = vunpack.c.l.b16 %v67
  %v154 = vunpack.c.h.b16 %v67
  %v155 = vpack.c.b16 %v125, %v123
  %v156 = vpack.c.b16 %v126, %v124
  %v157 = vpack.c.b16 %v129, %v127
  %v158 = vpack.c.b16 %v130, %v128
  %v159 = vpack.c.b16 %v133, %v131
  %v160 = vpack.c.b16 %v134, %v132
  %v161 = vpack.c.b16 %v137, %v135
  %v162 = vpack.c.b16 %v138, %v136
  %v163 = vpack.c.b16 %v141, %v139
  %v164 = vpack.c.b16 %v142, %v140
  %v165 = vpack.c.b16 %v145, %v143
  %v166 = vpack.c.b16 %v146, %v144
  %v167 = vpack.c.b16 %v149, %v147
  %v168 = vpack.c.b16 %v150, %v148
  %v169 = vpack.c.b16 %v153, %v151
  %v170 = vpack.c.b16 %v154, %v152
  %v219 = vunpack.c.l.b16 %v68
  %v220 = vunpack.c.l.b16 %v69
  %v221 = vunpack.c.l.b16 %v70
  %v222 = vunpack.c.l.b16 %v71
  %v223 = vunpack.c.l.b16 %v72
  %v224 = vunpack.c.l.b16 %v73
  %v225 = vunpack.c.l.b16 %v74
  %v226 = vunpack.c.l.b16 %v75
  %v227 = vunpack.c.l.b16 %v76
  %v228 = vunpack.c.l.b16 %v77
  %v229 = vunpack.c.l.b16 %v78
  %v230 = vunpack.c.l.b16 %v79
  %v231 = vunpack.c.l.b16 %v80
  %v232 = vunpack.c.l.b16 %v81
  %v233 = vunpack.c.l.b16 %v82
  %v234 = vunpack.c.l.b16 %v83
  %v235 = vunpack.c.l.b16 %v84
  %v236 = vunpack.c.l.b16 %v85
  %v237 = vunpack.c.l.b16 %v86
  %v238 = vunpack.c.l.b16 %v87
  %v239 = vunpack.c.l.b16 %v88
  %v240 = vunpack.c.l.b16 %v89
  %v241 = vunpack.c.l.b16 %v90
  %v242 = vunpack.c.l.b16 %v91
  %v243 = vunpack.c.l.b16 %v92
  %v244 = vunpack.c.l.b16 %v93
  %v245 = vunpack.c.l.b16 %v94
  %v246 = vunpack.c.l.b16 %v95
  %v247 = vunpack.c.l.b16 %v96
  %v248 = vunpack.c.l.b16 %v97
  %v249 = vunpack.c.l.b16 %v98
  %v250 = vunpack.c.l.b16 %v99
  %v251 = vpack.c.b16 %v220, %v219
  %v252 = vpack.c.b16 %v222, %v221
  %v253 = vpack.c.b16 %v224, %v223
  %v254 = vpack.c.b16 %v226, %v225
  %v255 = vpack.c.b16 %v228, %v227
  %v256 = vpack.c.b16 %v230, %v229
  %v257 = vpack.c.b16 %v232, %v231
  %v258 = vpack.c.b16 %v234, %v233
  %v259 = vpack.c.b16 %v236, %v235
  %v260 = vpack.c.b16 %v238, %v237
  %v261 = vpack.c.b16 %v240, %v239
  %v262 = vpack.c.b16 %v242, %v241
  %v263 = vpack.c.b16 %v244, %v243
  %v264 = vpack.c.b16 %v246, %v245
  %v265 = vpack.c.b16 %v248, %v247
  %v266 = vpack.c.b16 %v250, %v249
  %283 = vmatprep.subr.bf16.mxu0 0
  %284 = vmatpush1.bf16.msra.mxu0 %v251
  %285 = vmatprep.subr.bf16.mxu0 0
  %286 = vmatpush1.bf16.msra.mxu0 %v252
  %287 = vmatprep.subr.bf16.mxu0 0
  %288 = vmatpush1.bf16.msra.mxu0 %v253
  %289 = vmatprep.subr.bf16.mxu0 0
  %290 = vmatpush1.bf16.msra.mxu0 %v254
  %291 = vmatprep.subr.bf16.mxu0 0
  %292 = vmatpush1.bf16.msra.mxu0 %v255
  %293 = vmatprep.subr.bf16.mxu0 0
  %294 = vmatpush1.bf16.msra.mxu0 %v256
  %295 = vmatprep.subr.bf16.mxu0 0
  %296 = vmatpush1.bf16.msra.mxu0 %v257
  %297 = vmatprep.subr.bf16.mxu0 0
  %298 = vmatpush1.bf16.msra.mxu0 %v258
  %299 = vmatprep.subr.bf16.mxu0 0
  %300 = vmatpush1.bf16.msra.mxu0 %v259
  %301 = vmatprep.subr.bf16.mxu0 0
  %302 = vmatpush1.bf16.msra.mxu0 %v260
  %303 = vmatprep.subr.bf16.mxu0 0
  %304 = vmatpush1.bf16.msra.mxu0 %v261
  %305 = vmatprep.subr.bf16.mxu0 0
  %306 = vmatpush1.bf16.msra.mxu0 %v262
  %307 = vmatprep.subr.bf16.mxu0 0
  %308 = vmatpush1.bf16.msra.mxu0 %v263
  %309 = vmatprep.subr.bf16.mxu0 0
  %310 = vmatpush1.bf16.msra.mxu0 %v264
  %311 = vmatprep.subr.bf16.mxu0 0
  %312 = vmatpush1.bf16.msra.mxu0 %v265
  %313 = vmatprep.subr.bf16.mxu0 0
  %314 = vmatpush1.bf16.msra.mxu0 %v266
  %315 = vmatprep.mubr.bf16.mxu0 %v156
  %316 = vmatmul.mubr.bf16.gmra.mrb[0].mxu0 %v155
  %v317 = vpop.f32.mrb[0].mxu0
  %v318 = vadd.f32 %v105, %v317
  %v319 = vpop.f32.mrb[0].mxu0
  %v320 = vpop.f32.mrb[0].mxu0
  %v321 = vadd.f32 %v105, %v320
  %v322 = vpop.f32.mrb[0].mxu0
  %323 = vmatprep.mubr.bf16.mxu0 %v158
  %324 = vmatmul.mubr.bf16.gmra.mrb[0].mxu0 %v157
  %v325 = vpop.f32.mrb[0].mxu0
  %v326 = vadd.f32 %v105, %v325
  %v327 = vpop.f32.mrb[0].mxu0
  %v328 = vpop.f32.mrb[0].mxu0
  %v329 = vadd.f32 %v105, %v328
  %v330 = vpop.f32.mrb[0].mxu0
  %331 = vmatprep.mubr.bf16.mxu0 %v160
  %332 = vmatmul.mubr.bf16.gmra.mrb[0].mxu0 %v159
  %v333 = vpop.f32.mrb[0].mxu0
  %v334 = vadd.f32 %v105, %v333
  %v335 = vpop.f32.mrb[0].mxu0
  %v336 = vpop.f32.mrb[0].mxu0
  %v337 = vadd.f32 %v105, %v336
  %v338 = vpop.f32.mrb[0].mxu0
  %339 = vmatprep.mubr.bf16.mxu0 %v162
  %340 = vmatmul.mubr.bf16.gmra.mrb[0].mxu0 %v161
  %v341 = vpop.f32.mrb[0].mxu0
  %v342 = vadd.f32 %v105, %v341
  %v343 = vpop.f32.mrb[0].mxu0
  %v344 = vpop.f32.mrb[0].mxu0
  %v345 = vadd.f32 %v105, %v344
  %v346 = vpop.f32.mrb[0].mxu0
  %347 = vmatprep.mubr.bf16.mxu0 %v164
  %348 = vmatmul.mubr.bf16.gmra.mrb[0].mxu0 %v163
  %v349 = vpop.f32.mrb[0].mxu0
  %v350 = vadd.f32 %v105, %v349
  %v351 = vpop.f32.mrb[0].mxu0
  %v352 = vpop.f32.mrb[0].mxu0
  %v353 = vadd.f32 %v105, %v352
  %v354 = vpop.f32.mrb[0].mxu0
  %355 = vmatprep.mubr.bf16.mxu0 %v166
  %356 = vmatmul.mubr.bf16.gmra.mrb[0].mxu0 %v165
  %v357 = vpop.f32.mrb[0].mxu0
  %v358 = vadd.f32 %v105, %v357
  %v359 = vpop.f32.mrb[0].mxu0
  %v360 = vpop.f32.mrb[0].mxu0
  %v361 = vadd.f32 %v105, %v360
  %v362 = vpop.f32.mrb[0].mxu0
  %363 = vmatprep.mubr.bf16.mxu0 %v168
  %364 = vmatmul.mubr.bf16.gmra.mrb[0].mxu0 %v167
  %v365 = vpop.f32.mrb[0].mxu0
  %v366 = vadd.f32 %v105, %v365
  %v367 = vpop.f32.mrb[0].mxu0
  %v368 = vpop.f32.mrb[0].mxu0
  %v369 = vadd.f32 %v105, %v368
  %v370 = vpop.f32.mrb[0].mxu0
  %371 = vmatprep.mubr.bf16.mxu0 %v170
  %372 = vmatmul.mubr.bf16.gmra.mrb[0].mxu0 %v169
  %v373 = vpop.f32.mrb[0].mxu0
  %v374 = vadd.f32 %v105, %v373
  %v375 = vpop.f32.mrb[0].mxu0
  %v376 = vpop.f32.mrb[0].mxu0
  %v377 = vadd.f32 %v105, %v376
  %v378 = vpop.f32.mrb[0].mxu0
  %379 = vdwg.mxu0
  %v380 = vpack.c.bf16 %v321, %v318
  %v381 = vpack.c.bf16 %v329, %v326
  %v382 = vpack.c.bf16 %v337, %v334
  %v383 = vpack.c.bf16 %v345, %v342
  %v384 = vpack.c.bf16 %v353, %v350
  %v385 = vpack.c.bf16 %v361, %v358
  %v386 = vpack.c.bf16 %v369, %v366
  %v387 = vpack.c.bf16 %v377, %v374
  %v404 = vunpack.c.l.b16 %v36
  %v405 = vunpack.c.l.b16 %v37
  %v406 = vunpack.c.l.b16 %v38
  %v407 = vunpack.c.l.b16 %v39
  %v408 = vunpack.c.l.b16 %v40
  %v409 = vunpack.c.l.b16 %v41
  %v410 = vunpack.c.l.b16 %v42
  %v411 = vunpack.c.l.b16 %v43
  %v412 = vunpack.c.l.b16 %v44
  %v413 = vunpack.c.l.b16 %v45
  %v414 = vunpack.c.l.b16 %v46
  %v415 = vunpack.c.l.b16 %v47
  %v416 = vunpack.c.l.b16 %v48
  %v417 = vunpack.c.l.b16 %v49
  %v418 = vunpack.c.l.b16 %v50
  %v419 = vunpack.c.l.b16 %v51
  %v420 = vpack.c.b16 %v405, %v404
  %v421 = vpack.c.b16 %v407, %v406
  %v422 = vpack.c.b16 %v409, %v408
  %v423 = vpack.c.b16 %v411, %v410
  %v424 = vpack.c.b16 %v413, %v412
  %v425 = vpack.c.b16 %v415, %v414
  %v426 = vpack.c.b16 %v417, %v416
  %v427 = vpack.c.b16 %v419, %v418
  %436 = vmatprep.subr.bf16.mxu0 0
  %437 = vmatpush1.bf16.msra.mxu0 %v380
  %438 = vmatprep.subr.bf16.mxu0 0
  %439 = vmatpush1.bf16.msra.mxu0 %v381
  %440 = vmatprep.subr.bf16.mxu0 0
  %441 = vmatpush1.bf16.msra.mxu0 %v382
  %442 = vmatprep.subr.bf16.mxu0 0
  %443 = vmatpush1.bf16.msra.mxu0 %v383
  %444 = vmatprep.subr.bf16.mxu0 0
  %445 = vmatpush1.bf16.msra.mxu0 %v384
  %446 = vmatprep.subr.bf16.mxu0 0
  %447 = vmatpush1.bf16.msra.mxu0 %v385
  %448 = vmatprep.subr.bf16.mxu0 0
  %449 = vmatpush1.bf16.msra.mxu0 %v386
  %450 = vmatprep.subr.bf16.mxu0 0
  %451 = vmatpush1.bf16.msra.mxu0 %v387
  %452 = vmatprep.subr.bf16.mxu0 0
  %453 = vmatpush1.bf16.msra.mxu0 0
  %454 = vmatprep.subr.bf16.mxu0 0
  %455 = vmatpush1.bf16.msra.mxu0 0
  %456 = vmatprep.subr.bf16.mxu0 0
  %457 = vmatpush1.bf16.msra.mxu0 0
  %458 = vmatprep.subr.bf16.mxu0 0
  %459 = vmatpush1.bf16.msra.mxu0 0
  %460 = vmatprep.subr.bf16.mxu0 0
  %461 = vmatpush1.bf16.msra.mxu0 0
  %462 = vmatprep.subr.bf16.mxu0 0
  %463 = vmatpush1.bf16.msra.mxu0 0
  %464 = vmatprep.subr.bf16.mxu0 0
  %465 = vmatpush1.bf16.msra.mxu0 0
  %466 = vmatprep.subr.bf16.mxu0 0
  %467 = vmatpush1.bf16.msra.mxu0 0
  %468 = vmatprep.mubr.bf16.mxu0 0
  %469 = vmatmul.mubr.bf16.gmra.mrb[0].mxu0 %v420
  %v470 = vpop.f32.mrb[0].mxu0
  %v471 = vadd.f32 0.0, %v470
  %v472 = vpop.f32.mrb[0].mxu0
  %v473 = vpop.f32.mrb[0].mxu0
  %v474 = vadd.f32 0.0, %v473
  %v475 = vpop.f32.mrb[0].mxu0
  %476 = vmatprep.mubr.bf16.mxu0 0
  %477 = vmatmul.mubr.bf16.gmra.mrb[0].mxu0 %v421
  %v478 = vpop.f32.mrb[0].mxu0
  %v479 = vadd.f32 0.0, %v478
  %v480 = vpop.f32.mrb[0].mxu0
  %v481 = vpop.f32.mrb[0].mxu0
  %v482 = vadd.f32 0.0, %v481
  %v483 = vpop.f32.mrb[0].mxu0
  %484 = vmatprep.mubr.bf16.mxu0 0
  %485 = vmatmul.mubr.bf16.gmra.mrb[0].mxu0 %v422
  %v486 = vpop.f32.mrb[0].mxu0
  %v487 = vadd.f32 0.0, %v486
  %v488 = vpop.f32.mrb[0].mxu0
  %v489 = vpop.f32.mrb[0].mxu0
  %v490 = vadd.f32 0.0, %v489
  %v491 = vpop.f32.mrb[0].mxu0
  %492 = vmatprep.mubr.bf16.mxu0 0
  %493 = vmatmul.mubr.bf16.gmra.mrb[0].mxu0 %v423
  %v494 = vpop.f32.mrb[0].mxu0
  %v495 = vadd.f32 0.0, %v494
  %v496 = vpop.f32.mrb[0].mxu0
  %v497 = vpop.f32.mrb[0].mxu0
  %v498 = vadd.f32 0.0, %v497
  %v499 = vpop.f32.mrb[0].mxu0
  %500 = vmatprep.mubr.bf16.mxu0 0
  %501 = vmatmul.mubr.bf16.gmra.mrb[0].mxu0 %v424
  %v502 = vpop.f32.mrb[0].mxu0
  %v503 = vadd.f32 0.0, %v502
  %v504 = vpop.f32.mrb[0].mxu0
  %v505 = vpop.f32.mrb[0].mxu0
  %v506 = vadd.f32 0.0, %v505
  %v507 = vpop.f32.mrb[0].mxu0
  %508 = vmatprep.mubr.bf16.mxu0 0
  %509 = vmatmul.mubr.bf16.gmra.mrb[0].mxu0 %v425
  %v510 = vpop.f32.mrb[0].mxu0
  %v511 = vadd.f32 0.0, %v510
  %v512 = vpop.f32.mrb[0].mxu0
  %v513 = vpop.f32.mrb[0].mxu0
  %v514 = vadd.f32 0.0, %v513
  %v515 = vpop.f32.mrb[0].mxu0
  %516 = vmatprep.mubr.bf16.mxu0 0
  %517 = vmatmul.mubr.bf16.gmra.mrb[0].mxu0 %v426
  %v518 = vpop.f32.mrb[0].mxu0
  %v519 = vadd.f32 0.0, %v518
  %v520 = vpop.f32.mrb[0].mxu0
  %v521 = vpop.f32.mrb[0].mxu0
  %v522 = vadd.f32 0.0, %v521
  %v523 = vpop.f32.mrb[0].mxu0
  %524 = vmatprep.mubr.bf16.mxu0 0
  %525 = vmatmul.mubr.bf16.gmra.mrb[0].mxu0 %v427
  %v526 = vpop.f32.mrb[0].mxu0
  %v527 = vadd.f32 0.0, %v526
  %v528 = vpop.f32.mrb[0].mxu0
  %v529 = vpop.f32.mrb[0].mxu0
  %v530 = vadd.f32 0.0, %v529
  %v531 = vpop.f32.mrb[0].mxu0
  %532 = vdwg.mxu0
  %v533 = vpack.c.bf16 %v474, %v471
  %v534 = vpack.c.bf16 %v482, %v479
  %v535 = vpack.c.bf16 %v490, %v487
  %v536 = vpack.c.bf16 %v498, %v495
  %v537 = vpack.c.bf16 %v506, %v503
  %v538 = vpack.c.bf16 %v514, %v511
  %v539 = vpack.c.bf16 %v522, %v519
  %v540 = vpack.c.bf16 %v530, %v527
  %v541 = vld [vmem:[%s4] sm:$0xf]
  %v542 = vld [vmem:[%s4 + $0x4] sm:$0xf]
  %v543 = vld [vmem:[%s4 + $0x8] sm:$0xf]
  %v544 = vld [vmem:[%s4 + $0xc] sm:$0xf]
  %v545 = vld [vmem:[%s4 + $0x10] sm:$0xf]
  %v546 = vld [vmem:[%s4 + $0x14] sm:$0xf]
  %v547 = vld [vmem:[%s4 + $0x18] sm:$0xf]
  %v548 = vld [vmem:[%s4 + $0x1c] sm:$0xf]
  %v549 = vld [vmem:[%s4 + $0x20] sm:$0xf]
  %v550 = vld [vmem:[%s4 + $0x24] sm:$0xf]
  %v551 = vld [vmem:[%s4 + $0x28] sm:$0xf]
  %v552 = vld [vmem:[%s4 + $0x2c] sm:$0xf]
  %v553 = vld [vmem:[%s4 + $0x30] sm:$0xf]
  %v554 = vld [vmem:[%s4 + $0x34] sm:$0xf]
  %v555 = vld [vmem:[%s4 + $0x38] sm:$0xf]
  %v556 = vld [vmem:[%s4 + $0x3c] sm:$0xf]
  %v557 = vld [vmem:[%s4 + $0x40] sm:$0xf]
  %v558 = vld [vmem:[%s4 + $0x44] sm:$0xf]
  %v559 = vld [vmem:[%s4 + $0x48] sm:$0xf]
  %v560 = vld [vmem:[%s4 + $0x4c] sm:$0xf]
  %v561 = vld [vmem:[%s4 + $0x50] sm:$0xf]
  %v562 = vld [vmem:[%s4 + $0x54] sm:$0xf]
  %v563 = vld [vmem:[%s4 + $0x58] sm:$0xf]
  %v564 = vld [vmem:[%s4 + $0x5c] sm:$0xf]
  %v565 = vld [vmem:[%s4 + $0x60] sm:$0xf]
  %v566 = vld [vmem:[%s4 + $0x64] sm:$0xf]
  %v567 = vld [vmem:[%s4 + $0x68] sm:$0xf]
  %v568 = vld [vmem:[%s4 + $0x6c] sm:$0xf]
  %v569 = vld [vmem:[%s4 + $0x70] sm:$0xf]
  %v570 = vld [vmem:[%s4 + $0x74] sm:$0xf]
  %v571 = vld [vmem:[%s4 + $0x78] sm:$0xf]
  %v572 = vld [vmem:[%s4 + $0x7c] sm:$0xf]
  %v573 = vld [vmem:[%s5] sm:$0x1]
  %v575 = vlaneseq
  %v576 = vshrl.u32 %v575, 7
  %v577 = vsub.s32 0, %v576
  %v578 = vrot.slane %v573, %v577
  %v612 = vunpack.c.l.b16 %v541
  %v613 = vunpack.c.l.b16 %v542
  %v614 = vunpack.c.l.b16 %v543
  %v615 = vunpack.c.l.b16 %v544
  %v616 = vunpack.c.l.b16 %v545
  %v617 = vunpack.c.l.b16 %v546
  %v618 = vunpack.c.l.b16 %v547
  %v619 = vunpack.c.l.b16 %v548
  %v620 = vunpack.c.l.b16 %v549
  %v621 = vunpack.c.l.b16 %v550
  %v622 = vunpack.c.l.b16 %v551
  %v623 = vunpack.c.l.b16 %v552
  %v624 = vunpack.c.l.b16 %v553
  %v625 = vunpack.c.l.b16 %v554
  %v626 = vunpack.c.l.b16 %v555
  %v627 = vunpack.c.l.b16 %v556
  %v628 = vunpack.c.l.b16 %v557
  %v629 = vunpack.c.l.b16 %v558
  %v630 = vunpack.c.l.b16 %v559
  %v631 = vunpack.c.l.b16 %v560
  %v632 = vunpack.c.l.b16 %v561
  %v633 = vunpack.c.l.b16 %v562
  %v634 = vunpack.c.l.b16 %v563
  %v635 = vunpack.c.l.b16 %v564
  %v636 = vunpack.c.l.b16 %v565
  %v637 = vunpack.c.l.b16 %v566
  %v638 = vunpack.c.l.b16 %v567
  %v639 = vunpack.c.l.b16 %v568
  %v640 = vunpack.c.l.b16 %v569
  %v641 = vunpack.c.l.b16 %v570
  %v642 = vunpack.c.l.b16 %v571
  %v643 = vunpack.c.l.b16 %v572
  %v644 = vpack.c.b16 %v613, %v612
  %v645 = vpack.c.b16 %v615, %v614
  %v646 = vpack.c.b16 %v617, %v616
  %v647 = vpack.c.b16 %v619, %v618
  %v648 = vpack.c.b16 %v621, %v620
  %v649 = vpack.c.b16 %v623, %v622
  %v650 = vpack.c.b16 %v625, %v624
  %v651 = vpack.c.b16 %v627, %v626
  %v652 = vpack.c.b16 %v629, %v628
  %v653 = vpack.c.b16 %v631, %v630
  %v654 = vpack.c.b16 %v633, %v632
  %v655 = vpack.c.b16 %v635, %v634
  %v656 = vpack.c.b16 %v637, %v636
  %v657 = vpack.c.b16 %v639, %v638
  %v658 = vpack.c.b16 %v641, %v640
  %v659 = vpack.c.b16 %v643, %v642
  %676 = vmatprep.subr.bf16.mxu0 0
  %677 = vmatpush1.bf16.msra.mxu0 %v644
  %678 = vmatprep.subr.bf16.mxu0 0
  %679 = vmatpush1.bf16.msra.mxu0 %v645
  %680 = vmatprep.subr.bf16.mxu0 0
  %681 = vmatpush1.bf16.msra.mxu0 %v646
  %682 = vmatprep.subr.bf16.mxu0 0
  %683 = vmatpush1.bf16.msra.mxu0 %v647
  %684 = vmatprep.subr.bf16.mxu0 0
  %685 = vmatpush1.bf16.msra.mxu0 %v648
  %686 = vmatprep.subr.bf16.mxu0 0
  %687 = vmatpush1.bf16.msra.mxu0 %v649
  %688 = vmatprep.subr.bf16.mxu0 0
  %689 = vmatpush1.bf16.msra.mxu0 %v650
  %690 = vmatprep.subr.bf16.mxu0 0
  %691 = vmatpush1.bf16.msra.mxu0 %v651
  %692 = vmatprep.subr.bf16.mxu0 0
  %693 = vmatpush1.bf16.msra.mxu0 %v652
  %694 = vmatprep.subr.bf16.mxu0 0
  %695 = vmatpush1.bf16.msra.mxu0 %v653
  %696 = vmatprep.subr.bf16.mxu0 0
  %697 = vmatpush1.bf16.msra.mxu0 %v654
  %698 = vmatprep.subr.bf16.mxu0 0
  %699 = vmatpush1.bf16.msra.mxu0 %v655
  %700 = vmatprep.subr.bf16.mxu0 0
  %701 = vmatpush1.bf16.msra.mxu0 %v656
  %702 = vmatprep.subr.bf16.mxu0 0
  %703 = vmatpush1.bf16.msra.mxu0 %v657
  %704 = vmatprep.subr.bf16.mxu0 0
  %705 = vmatpush1.bf16.msra.mxu0 %v658
  %706 = vmatprep.subr.bf16.mxu0 0
  %707 = vmatpush1.bf16.msra.mxu0 %v659
  %708 = vmatprep.mubr.bf16.mxu0 %v380
  %709 = vmatmul.mubr.bf16.gmra.mrb[0].mxu0 %v533
  %v710 = vpop.f32.mrb[0].mxu0
  %v711 = vadd.f32 %v578, %v710
  %v712 = vpop.f32.mrb[0].mxu0
  %v713 = vpop.f32.mrb[0].mxu0
  %v714 = vadd.f32 %v578, %v713
  %v715 = vpop.f32.mrb[0].mxu0
  %716 = vmatprep.mubr.bf16.mxu0 %v381
  %717 = vmatmul.mubr.bf16.gmra.mrb[0].mxu0 %v534
  %v718 = vpop.f32.mrb[0].mxu0
  %v719 = vadd.f32 %v578, %v718
  %v720 = vpop.f32.mrb[0].mxu0
  %v721 = vpop.f32.mrb[0].mxu0
  %v722 = vadd.f32 %v578, %v721
  %v723 = vpop.f32.mrb[0].mxu0
  %724 = vmatprep.mubr.bf16.mxu0 %v382
  %725 = vmatmul.mubr.bf16.gmra.mrb[0].mxu0 %v535
  %v726 = vpop.f32.mrb[0].mxu0
  %v727 = vadd.f32 %v578, %v726
  %v728 = vpop.f32.mrb[0].mxu0
  %v729 = vpop.f32.mrb[0].mxu0
  %v730 = vadd.f32 %v578, %v729
  %v731 = vpop.f32.mrb[0].mxu0
  %732 = vmatprep.mubr.bf16.mxu0 %v383
  %733 = vmatmul.mubr.bf16.gmra.mrb[0].mxu0 %v536
  %v734 = vpop.f32.mrb[0].mxu0
  %v735 = vadd.f32 %v578, %v734
  %v736 = vpop.f32.mrb[0].mxu0
  %v737 = vpop.f32.mrb[0].mxu0
  %v738 = vadd.f32 %v578, %v737
  %v739 = vpop.f32.mrb[0].mxu0
  %740 = vmatprep.mubr.bf16.mxu0 %v384
  %741 = vmatmul.mubr.bf16.gmra.mrb[0].mxu0 %v537
  %v742 = vpop.f32.mrb[0].mxu0
  %v743 = vadd.f32 %v578, %v742
  %v744 = vpop.f32.mrb[0].mxu0
  %v745 = vpop.f32.mrb[0].mxu0
  %v746 = vadd.f32 %v578, %v745
  %v747 = vpop.f32.mrb[0].mxu0
  %748 = vmatprep.mubr.bf16.mxu0 %v385
  %749 = vmatmul.mubr.bf16.gmra.mrb[0].mxu0 %v538
  %v750 = vpop.f32.mrb[0].mxu0
  %v751 = vadd.f32 %v578, %v750
  %v752 = vpop.f32.mrb[0].mxu0
  %v753 = vpop.f32.mrb[0].mxu0
  %v754 = vadd.f32 %v578, %v753
  %v755 = vpop.f32.mrb[0].mxu0
  %756 = vmatprep.mubr.bf16.mxu0 %v386
  %757 = vmatmul.mubr.bf16.gmra.mrb[0].mxu0 %v539
  %v758 = vpop.f32.mrb[0].mxu0
  %v759 = vadd.f32 %v578, %v758
  %v760 = vpop.f32.mrb[0].mxu0
  %v761 = vpop.f32.mrb[0].mxu0
  %v762 = vadd.f32 %v578, %v761
  %v763 = vpop.f32.mrb[0].mxu0
  %764 = vmatprep.mubr.bf16.mxu0 %v387
  %765 = vmatmul.mubr.bf16.gmra.mrb[0].mxu0 %v540
  %v766 = vpop.f32.mrb[0].mxu0
  %v767 = vadd.f32 %v578, %v766
  %v768 = vpop.f32.mrb[0].mxu0
  %v769 = vpop.f32.mrb[0].mxu0
  %v770 = vadd.f32 %v578, %v769
  %v771 = vpop.f32.mrb[0].mxu0
  %772 = vdwg.mxu0
  %v773 = vmax.f32 %v711, 0.0
  %v774 = vmax.f32 %v714, 0.0
  %v775 = vmax.f32 %v719, 0.0
  %v776 = vmax.f32 %v722, 0.0
  %v777 = vmax.f32 %v727, 0.0
  %v778 = vmax.f32 %v730, 0.0
  %v779 = vmax.f32 %v735, 0.0
  %v780 = vmax.f32 %v738, 0.0
  %v781 = vmax.f32 %v743, 0.0
  %v782 = vmax.f32 %v746, 0.0
  %v783 = vmax.f32 %v751, 0.0
  %v784 = vmax.f32 %v754, 0.0
  %v785 = vmax.f32 %v759, 0.0
  %v786 = vmax.f32 %v762, 0.0
  %v787 = vmax.f32 %v767, 0.0
  %v788 = vmax.f32 %v770, 0.0
  %v789 = vpack.c.bf16 %v774, %v773
  %v790 = vpack.c.bf16 %v776, %v775
  %v791 = vpack.c.bf16 %v778, %v777
  %v792 = vpack.c.bf16 %v780, %v779
  %v793 = vpack.c.bf16 %v782, %v781
  %v794 = vpack.c.bf16 %v784, %v783
  %v795 = vpack.c.bf16 %v786, %v785
  %v796 = vpack.c.bf16 %v788, %v787
  %797 = vmatprep.subr.bf16.mxu0 0
  %798 = vmatpush1.bf16.msra.mxu0 %v789
  %799 = vmatprep.subr.bf16.mxu0 0
  %800 = vmatpush1.bf16.msra.mxu0 %v790
  %801 = vmatprep.subr.bf16.mxu0 0
  %802 = vmatpush1.bf16.msra.mxu0 %v791
  %803 = vmatprep.subr.bf16.mxu0 0
  %804 = vmatpush1.bf16.msra.mxu0 %v792
  %805 = vmatprep.subr.bf16.mxu0 0
  %806 = vmatpush1.bf16.msra.mxu0 %v793
  %807 = vmatprep.subr.bf16.mxu0 0
  %808 = vmatpush1.bf16.msra.mxu0 %v794
  %809 = vmatprep.subr.bf16.mxu0 0
  %810 = vmatpush1.bf16.msra.mxu0 %v795
  %811 = vmatprep.subr.bf16.mxu0 0
  %812 = vmatpush1.bf16.msra.mxu0 %v796
  %813 = vmatprep.subr.bf16.mxu0 0
  %814 = vmatpush1.bf16.msra.mxu0 0
  %815 = vmatprep.subr.bf16.mxu0 0
  %816 = vmatpush1.bf16.msra.mxu0 0
  %817 = vmatprep.subr.bf16.mxu0 0
  %818 = vmatpush1.bf16.msra.mxu0 0
  %819 = vmatprep.subr.bf16.mxu0 0
  %820 = vmatpush1.bf16.msra.mxu0 0
  %821 = vmatprep.subr.bf16.mxu0 0
  %822 = vmatpush1.bf16.msra.mxu0 0
  %823 = vmatprep.subr.bf16.mxu0 0
  %824 = vmatpush1.bf16.msra.mxu0 0
  %825 = vmatprep.subr.bf16.mxu0 0
  %826 = vmatpush1.bf16.msra.mxu0 0
  %827 = vmatprep.subr.bf16.mxu0 0
  %828 = vmatpush1.bf16.msra.mxu0 0
  %829 = vmatprep.mubr.bf16.mxu0 0
  %830 = vmatmul.mubr.bf16.gmra.mrb[0].mxu0 %v420
  %v831 = vpop.f32.mrb[0].mxu0
  %v832 = vadd.f32 0.0, %v831
  %v833 = vpop.f32.mrb[0].mxu0
  %v834 = vpop.f32.mrb[0].mxu0
  %v835 = vadd.f32 0.0, %v834
  %v836 = vpop.f32.mrb[0].mxu0
  %837 = vmatprep.mubr.bf16.mxu0 0
  %838 = vmatmul.mubr.bf16.gmra.mrb[0].mxu0 %v421
  %v839 = vpop.f32.mrb[0].mxu0
  %v840 = vadd.f32 0.0, %v839
  %v841 = vpop.f32.mrb[0].mxu0
  %v842 = vpop.f32.mrb[0].mxu0
  %v843 = vadd.f32 0.0, %v842
  %v844 = vpop.f32.mrb[0].mxu0
  %845 = vmatprep.mubr.bf16.mxu0 0
  %846 = vmatmul.mubr.bf16.gmra.mrb[0].mxu0 %v422
  %v847 = vpop.f32.mrb[0].mxu0
  %v848 = vadd.f32 0.0, %v847
  %v849 = vpop.f32.mrb[0].mxu0
  %v850 = vpop.f32.mrb[0].mxu0
  %v851 = vadd.f32 0.0, %v850
  %v852 = vpop.f32.mrb[0].mxu0
  %853 = vmatprep.mubr.bf16.mxu0 0
  %854 = vmatmul.mubr.bf16.gmra.mrb[0].mxu0 %v423
  %v855 = vpop.f32.mrb[0].mxu0
  %v856 = vadd.f32 0.0, %v855
  %v857 = vpop.f32.mrb[0].mxu0
  %v858 = vpop.f32.mrb[0].mxu0
  %v859 = vadd.f32 0.0, %v858
  %v860 = vpop.f32.mrb[0].mxu0
  %861 = vmatprep.mubr.bf16.mxu0 0
  %862 = vmatmul.mubr.bf16.gmra.mrb[0].mxu0 %v424
  %v863 = vpop.f32.mrb[0].mxu0
  %v864 = vadd.f32 0.0, %v863
  %v865 = vpop.f32.mrb[0].mxu0
  %v866 = vpop.f32.mrb[0].mxu0
  %v867 = vadd.f32 0.0, %v866
  %v868 = vpop.f32.mrb[0].mxu0
  %869 = vmatprep.mubr.bf16.mxu0 0
  %870 = vmatmul.mubr.bf16.gmra.mrb[0].mxu0 %v425
  %v871 = vpop.f32.mrb[0].mxu0
  %v872 = vadd.f32 0.0, %v871
  %v873 = vpop.f32.mrb[0].mxu0
  %v874 = vpop.f32.mrb[0].mxu0
  %v875 = vadd.f32 0.0, %v874
  %v876 = vpop.f32.mrb[0].mxu0
  %877 = vmatprep.mubr.bf16.mxu0 0
  %878 = vmatmul.mubr.bf16.gmra.mrb[0].mxu0 %v426
  %v879 = vpop.f32.mrb[0].mxu0
  %v880 = vadd.f32 0.0, %v879
  %v881 = vpop.f32.mrb[0].mxu0
  %v882 = vpop.f32.mrb[0].mxu0
  %v883 = vadd.f32 0.0, %v882
  %v884 = vpop.f32.mrb[0].mxu0
  %885 = vmatprep.mubr.bf16.mxu0 0
  %886 = vmatmul.mubr.bf16.gmra.mrb[0].mxu0 %v427
  %v887 = vpop.f32.mrb[0].mxu0
  %v888 = vadd.f32 0.0, %v887
  %v889 = vpop.f32.mrb[0].mxu0
  %v890 = vpop.f32.mrb[0].mxu0
  %v891 = vadd.f32 0.0, %v890
  %v892 = vpop.f32.mrb[0].mxu0
  %893 = vdwg.mxu0
  %v894 = vpack.c.bf16 %v835, %v832
  %v895 = vpack.c.bf16 %v843, %v840
  %v896 = vpack.c.bf16 %v851, %v848
  %v897 = vpack.c.bf16 %v859, %v856
  %v898 = vpack.c.bf16 %v867, %v864
  %v899 = vpack.c.bf16 %v875, %v872
  %v900 = vpack.c.bf16 %v883, %v880
  %v901 = vpack.c.bf16 %v891, %v888
  %v902 = vld [vmem:[%s6] sm:$0xf]
  %v903 = vld [vmem:[%s6 + $0x4] sm:$0xf]
  %v904 = vld [vmem:[%s6 + $0x8] sm:$0xf]
  %v905 = vld [vmem:[%s6 + $0xc] sm:$0xf]
  %v906 = vld [vmem:[%s6 + $0x10] sm:$0xf]
  %v907 = vld [vmem:[%s6 + $0x14] sm:$0xf]
  %v908 = vld [vmem:[%s6 + $0x18] sm:$0xf]
  %v909 = vld [vmem:[%s6 + $0x1c] sm:$0xf]
  %v910 = vld [vmem:[%s6 + $0x20] sm:$0xf]
  %v911 = vld [vmem:[%s6 + $0x24] sm:$0xf]
  %v912 = vld [vmem:[%s6 + $0x28] sm:$0xf]
  %v913 = vld [vmem:[%s6 + $0x2c] sm:$0xf]
  %v914 = vld [vmem:[%s6 + $0x30] sm:$0xf]
  %v915 = vld [vmem:[%s6 + $0x34] sm:$0xf]
  %v916 = vld [vmem:[%s6 + $0x38] sm:$0xf]
  %v917 = vld [vmem:[%s6 + $0x3c] sm:$0xf]
  %v918 = vld [vmem:[%s6 + $0x40] sm:$0xf]
  %v919 = vld [vmem:[%s6 + $0x44] sm:$0xf]
  %v920 = vld [vmem:[%s6 + $0x48] sm:$0xf]
  %v921 = vld [vmem:[%s6 + $0x4c] sm:$0xf]
  %v922 = vld [vmem:[%s6 + $0x50] sm:$0xf]
  %v923 = vld [vmem:[%s6 + $0x54] sm:$0xf]
  %v924 = vld [vmem:[%s6 + $0x58] sm:$0xf]
  %v925 = vld [vmem:[%s6 + $0x5c] sm:$0xf]
  %v926 = vld [vmem:[%s6 + $0x60] sm:$0xf]
  %v927 = vld [vmem:[%s6 + $0x64] sm:$0xf]
  %v928 = vld [vmem:[%s6 + $0x68] sm:$0xf]
  %v929 = vld [vmem:[%s6 + $0x6c] sm:$0xf]
  %v930 = vld [vmem:[%s6 + $0x70] sm:$0xf]
  %v931 = vld [vmem:[%s6 + $0x74] sm:$0xf]
  %v932 = vld [vmem:[%s6 + $0x78] sm:$0xf]
  %v933 = vld [vmem:[%s6 + $0x7c] sm:$0xf]
  %v934 = vld [vmem:[%s7] sm:$0x1]
  %v936 = vlaneseq
  %v937 = vshrl.u32 %v936, 7
  %v938 = vsub.s32 0, %v937
  %v939 = vrot.slane %v934, %v938
  %v973 = vunpack.c.l.b16 %v902
  %v974 = vunpack.c.l.b16 %v903
  %v975 = vunpack.c.l.b16 %v904
  %v976 = vunpack.c.l.b16 %v905
  %v977 = vunpack.c.l.b16 %v906
  %v978 = vunpack.c.l.b16 %v907
  %v979 = vunpack.c.l.b16 %v908
  %v980 = vunpack.c.l.b16 %v909
  %v981 = vunpack.c.l.b16 %v910
  %v982 = vunpack.c.l.b16 %v911
  %v983 = vunpack.c.l.b16 %v912
  %v984 = vunpack.c.l.b16 %v913
  %v985 = vunpack.c.l.b16 %v914
  %v986 = vunpack.c.l.b16 %v915
  %v987 = vunpack.c.l.b16 %v916
  %v988 = vunpack.c.l.b16 %v917
  %v989 = vunpack.c.l.b16 %v918
  %v990 = vunpack.c.l.b16 %v919
  %v991 = vunpack.c.l.b16 %v920
  %v992 = vunpack.c.l.b16 %v921
  %v993 = vunpack.c.l.b16 %v922
  %v994 = vunpack.c.l.b16 %v923
  %v995 = vunpack.c.l.b16 %v924
  %v996 = vunpack.c.l.b16 %v925
  %v997 = vunpack.c.l.b16 %v926
  %v998 = vunpack.c.l.b16 %v927
  %v999 = vunpack.c.l.b16 %v928
  %v1000 = vunpack.c.l.b16 %v929
  %v1001 = vunpack.c.l.b16 %v930
  %v1002 = vunpack.c.l.b16 %v931
  %v1003 = vunpack.c.l.b16 %v932
  %v1004 = vunpack.c.l.b16 %v933
  %v1005 = vpack.c.b16 %v974, %v973
  %v1006 = vpack.c.b16 %v976, %v975
  %v1007 = vpack.c.b16 %v978, %v977
  %v1008 = vpack.c.b16 %v980, %v979
  %v1009 = vpack.c.b16 %v982, %v981
  %v1010 = vpack.c.b16 %v984, %v983
  %v1011 = vpack.c.b16 %v986, %v985
  %v1012 = vpack.c.b16 %v988, %v987
  %v1013 = vpack.c.b16 %v990, %v989
  %v1014 = vpack.c.b16 %v992, %v991
  %v1015 = vpack.c.b16 %v994, %v993
  %v1016 = vpack.c.b16 %v996, %v995
  %v1017 = vpack.c.b16 %v998, %v997
  %v1018 = vpack.c.b16 %v1000, %v999
  %v1019 = vpack.c.b16 %v1002, %v1001
  %v1020 = vpack.c.b16 %v1004, %v1003
  %1037 = vmatprep.subr.bf16.mxu0 0
  %1038 = vmatpush1.bf16.msra.mxu0 %v1005
  %1039 = vmatprep.subr.bf16.mxu0 0
  %1040 = vmatpush1.bf16.msra.mxu0 %v1006
  %1041 = vmatprep.subr.bf16.mxu0 0
  %1042 = vmatpush1.bf16.msra.mxu0 %v1007
  %1043 = vmatprep.subr.bf16.mxu0 0
  %1044 = vmatpush1.bf16.msra.mxu0 %v1008
  %1045 = vmatprep.subr.bf16.mxu0 0
  %1046 = vmatpush1.bf16.msra.mxu0 %v1009
  %1047 = vmatprep.subr.bf16.mxu0 0
  %1048 = vmatpush1.bf16.msra.mxu0 %v1010
  %1049 = vmatprep.subr.bf16.mxu0 0
  %1050 = vmatpush1.bf16.msra.mxu0 %v1011
  %1051 = vmatprep.subr.bf16.mxu0 0
  %1052 = vmatpush1.bf16.msra.mxu0 %v1012
  %1053 = vmatprep.subr.bf16.mxu0 0
  %1054 = vmatpush1.bf16.msra.mxu0 %v1013
  %1055 = vmatprep.subr.bf16.mxu0 0
  %1056 = vmatpush1.bf16.msra.mxu0 %v1014
  %1057 = vmatprep.subr.bf16.mxu0 0
  %1058 = vmatpush1.bf16.msra.mxu0 %v1015
  %1059 = vmatprep.subr.bf16.mxu0 0
  %1060 = vmatpush1.bf16.msra.mxu0 %v1016
  %1061 = vmatprep.subr.bf16.mxu0 0
  %1062 = vmatpush1.bf16.msra.mxu0 %v1017
  %1063 = vmatprep.subr.bf16.mxu0 0
  %1064 = vmatpush1.bf16.msra.mxu0 %v1018
  %1065 = vmatprep.subr.bf16.mxu0 0
  %1066 = vmatpush1.bf16.msra.mxu0 %v1019
  %1067 = vmatprep.subr.bf16.mxu0 0
  %1068 = vmatpush1.bf16.msra.mxu0 %v1020
  %1069 = vmatprep.mubr.bf16.mxu0 %v789
  %1070 = vmatmul.mubr.bf16.gmra.mrb[0].mxu0 %v894
  %v1071 = vpop.f32.mrb[0].mxu0
  %v1072 = vadd.f32 %v939, %v1071
  %v1073 = vpop.f32.mrb[0].mxu0
  %v1074 = vpop.f32.mrb[0].mxu0
  %v1075 = vadd.f32 %v939, %v1074
  %v1076 = vpop.f32.mrb[0].mxu0
  %1077 = vmatprep.mubr.bf16.mxu0 %v790
  %1078 = vmatmul.mubr.bf16.gmra.mrb[0].mxu0 %v895
  %v1079 = vpop.f32.mrb[0].mxu0
  %v1080 = vadd.f32 %v939, %v1079
  %v1081 = vpop.f32.mrb[0].mxu0
  %v1082 = vpop.f32.mrb[0].mxu0
  %v1083 = vadd.f32 %v939, %v1082
  %v1084 = vpop.f32.mrb[0].mxu0
  %1085 = vmatprep.mubr.bf16.mxu0 %v791
  %1086 = vmatmul.mubr.bf16.gmra.mrb[0].mxu0 %v896
  %v1087 = vpop.f32.mrb[0].mxu0
  %v1088 = vadd.f32 %v939, %v1087
  %v1089 = vpop.f32.mrb[0].mxu0
  %v1090 = vpop.f32.mrb[0].mxu0
  %v1091 = vadd.f32 %v939, %v1090
  %v1092 = vpop.f32.mrb[0].mxu0
  %1093 = vmatprep.mubr.bf16.mxu0 %v792
  %1094 = vmatmul.mubr.bf16.gmra.mrb[0].mxu0 %v897
  %v1095 = vpop.f32.mrb[0].mxu0
  %v1096 = vadd.f32 %v939, %v1095
  %v1097 = vpop.f32.mrb[0].mxu0
  %v1098 = vpop.f32.mrb[0].mxu0
  %v1099 = vadd.f32 %v939, %v1098
  %v1100 = vpop.f32.mrb[0].mxu0
  %1101 = vmatprep.mubr.bf16.mxu0 %v793
  %1102 = vmatmul.mubr.bf16.gmra.mrb[0].mxu0 %v898
  %v1103 = vpop.f32.mrb[0].mxu0
  %v1104 = vadd.f32 %v939, %v1103
  %v1105 = vpop.f32.mrb[0].mxu0
  %v1106 = vpop.f32.mrb[0].mxu0
  %v1107 = vadd.f32 %v939, %v1106
  %v1108 = vpop.f32.mrb[0].mxu0
  %1109 = vmatprep.mubr.bf16.mxu0 %v794
  %1110 = vmatmul.mubr.bf16.gmra.mrb[0].mxu0 %v899
  %v1111 = vpop.f32.mrb[0].mxu0
  %v1112 = vadd.f32 %v939, %v1111
  %v1113 = vpop.f32.mrb[0].mxu0
  %v1114 = vpop.f32.mrb[0].mxu0
  %v1115 = vadd.f32 %v939, %v1114
  %v1116 = vpop.f32.mrb[0].mxu0
  %1117 = vmatprep.mubr.bf16.mxu0 %v795
  %1118 = vmatmul.mubr.bf16.gmra.mrb[0].mxu0 %v900
  %v1119 = vpop.f32.mrb[0].mxu0
  %v1120 = vadd.f32 %v939, %v1119
  %v1121 = vpop.f32.mrb[0].mxu0
  %v1122 = vpop.f32.mrb[0].mxu0
  %v1123 = vadd.f32 %v939, %v1122
  %v1124 = vpop.f32.mrb[0].mxu0
  %1125 = vmatprep.mubr.bf16.mxu0 %v796
  %1126 = vmatmul.mubr.bf16.gmra.mrb[0].mxu0 %v901
  %v1127 = vpop.f32.mrb[0].mxu0
  %v1128 = vadd.f32 %v939, %v1127
  %v1129 = vpop.f32.mrb[0].mxu0
  %v1130 = vpop.f32.mrb[0].mxu0
  %v1131 = vadd.f32 %v939, %v1130
  %v1132 = vpop.f32.mrb[0].mxu0
  %1133 = vdwg.mxu0
  %v1134 = vpack.c.bf16 %v1075, %v1072
  %v1135 = vpack.c.bf16 %v1083, %v1080
  %v1136 = vpack.c.bf16 %v1091, %v1088
  %v1137 = vpack.c.bf16 %v1099, %v1096
  %v1138 = vpack.c.bf16 %v1107, %v1104
  %v1139 = vpack.c.bf16 %v1115, %v1112
  %v1140 = vpack.c.bf16 %v1123, %v1120
  %v1141 = vpack.c.bf16 %v1131, %v1128
  %v1142 = vld [vmem:[%s8] sm:$0xf]
  %v1143 = vld [vmem:[%s8 + $0x4] sm:$0xf]
  %v1144 = vld [vmem:[%s8 + $0x8] sm:$0xf]
  %v1145 = vld [vmem:[%s8 + $0xc] sm:$0xf]
  %v1146 = vld [vmem:[%s8 + $0x10] sm:$0xf]
  %v1147 = vld [vmem:[%s8 + $0x14] sm:$0xf]
  %v1148 = vld [vmem:[%s8 + $0x18] sm:$0xf]
  %v1149 = vld [vmem:[%s8 + $0x1c] sm:$0xf]
  %v1150 = vld [vmem:[%s8 + $0x20] sm:$0xf]
  %v1151 = vld [vmem:[%s8 + $0x24] sm:$0xf]
  %v1152 = vld [vmem:[%s8 + $0x28] sm:$0xf]
  %v1153 = vld [vmem:[%s8 + $0x2c] sm:$0xf]
  %v1154 = vld [vmem:[%s8 + $0x30] sm:$0xf]
  %v1155 = vld [vmem:[%s8 + $0x34] sm:$0xf]
  %v1156 = vld [vmem:[%s8 + $0x38] sm:$0xf]
  %v1157 = vld [vmem:[%s8 + $0x3c] sm:$0xf]
  %v1174 = vunpack.c.l.b16 %v1142
  %v1175 = vunpack.c.l.b16 %v1143
  %v1176 = vunpack.c.l.b16 %v1144
  %v1177 = vunpack.c.l.b16 %v1145
  %v1178 = vunpack.c.l.b16 %v1146
  %v1179 = vunpack.c.l.b16 %v1147
  %v1180 = vunpack.c.l.b16 %v1148
  %v1181 = vunpack.c.l.b16 %v1149
  %v1182 = vunpack.c.l.b16 %v1150
  %v1183 = vunpack.c.l.b16 %v1151
  %v1184 = vunpack.c.l.b16 %v1152
  %v1185 = vunpack.c.l.b16 %v1153
  %v1186 = vunpack.c.l.b16 %v1154
  %v1187 = vunpack.c.l.b16 %v1155
  %v1188 = vunpack.c.l.b16 %v1156
  %v1189 = vunpack.c.l.b16 %v1157
  %v1190 = vpack.c.b16 %v1175, %v1174
  %v1191 = vpack.c.b16 %v1177, %v1176
  %v1192 = vpack.c.b16 %v1179, %v1178
  %v1193 = vpack.c.b16 %v1181, %v1180
  %v1194 = vpack.c.b16 %v1183, %v1182
  %v1195 = vpack.c.b16 %v1185, %v1184
  %v1196 = vpack.c.b16 %v1187, %v1186
  %v1197 = vpack.c.b16 %v1189, %v1188
  %1206 = vmatprep.subr.bf16.mxu0 0
  %1207 = vmatpush1.bf16.msra.mxu0 %v1134
  %1208 = vmatprep.subr.bf16.mxu0 0
  %1209 = vmatpush1.bf16.msra.mxu0 %v1135
  %1210 = vmatprep.subr.bf16.mxu0 0
  %1211 = vmatpush1.bf16.msra.mxu0 %v1136
  %1212 = vmatprep.subr.bf16.mxu0 0
  %1213 = vmatpush1.bf16.msra.mxu0 %v1137
  %1214 = vmatprep.subr.bf16.mxu0 0
  %1215 = vmatpush1.bf16.msra.mxu0 %v1138
  %1216 = vmatprep.subr.bf16.mxu0 0
  %1217 = vmatpush1.bf16.msra.mxu0 %v1139
  %1218 = vmatprep.subr.bf16.mxu0 0
  %1219 = vmatpush1.bf16.msra.mxu0 %v1140
  %1220 = vmatprep.subr.bf16.mxu0 0
  %1221 = vmatpush1.bf16.msra.mxu0 %v1141
  %1222 = vmatprep.subr.bf16.mxu0 0
  %1223 = vmatpush1.bf16.msra.mxu0 0
  %1224 = vmatprep.subr.bf16.mxu0 0
  %1225 = vmatpush1.bf16.msra.mxu0 0
  %1226 = vmatprep.subr.bf16.mxu0 0
  %1227 = vmatpush1.bf16.msra.mxu0 0
  %1228 = vmatprep.subr.bf16.mxu0 0
  %1229 = vmatpush1.bf16.msra.mxu0 0
  %1230 = vmatprep.subr.bf16.mxu0 0
  %1231 = vmatpush1.bf16.msra.mxu0 0
  %1232 = vmatprep.subr.bf16.mxu0 0
  %1233 = vmatpush1.bf16.msra.mxu0 0
  %1234 = vmatprep.subr.bf16.mxu0 0
  %1235 = vmatpush1.bf16.msra.mxu0 0
  %1236 = vmatprep.subr.bf16.mxu0 0
  %1237 = vmatpush1.bf16.msra.mxu0 0
  %1238 = vmatprep.mubr.bf16.mxu0 0
  %1239 = vmatmul.mubr.bf16.gmra.mrb[0].mxu0 %v1190
  %v1240 = vpop.f32.mrb[0].mxu0
  %v1241 = vadd.f32 0.0, %v1240
  %v1242 = vpop.f32.mrb[0].mxu0
  %v1243 = vpop.f32.mrb[0].mxu0
  %v1244 = vadd.f32 0.0, %v1243
  %v1245 = vpop.f32.mrb[0].mxu0
  %1246 = vmatprep.mubr.bf16.mxu0 0
  %1247 = vmatmul.mubr.bf16.gmra.mrb[0].mxu0 %v1191
  %v1248 = vpop.f32.mrb[0].mxu0
  %v1249 = vadd.f32 0.0, %v1248
  %v1250 = vpop.f32.mrb[0].mxu0
  %v1251 = vpop.f32.mrb[0].mxu0
  %v1252 = vadd.f32 0.0, %v1251
  %v1253 = vpop.f32.mrb[0].mxu0
  %1254 = vmatprep.mubr.bf16.mxu0 0
  %1255 = vmatmul.mubr.bf16.gmra.mrb[0].mxu0 %v1192
  %v1256 = vpop.f32.mrb[0].mxu0
  %v1257 = vadd.f32 0.0, %v1256
  %v1258 = vpop.f32.mrb[0].mxu0
  %v1259 = vpop.f32.mrb[0].mxu0
  %v1260 = vadd.f32 0.0, %v1259
  %v1261 = vpop.f32.mrb[0].mxu0
  %1262 = vmatprep.mubr.bf16.mxu0 0
  %1263 = vmatmul.mubr.bf16.gmra.mrb[0].mxu0 %v1193
  %v1264 = vpop.f32.mrb[0].mxu0
  %v1265 = vadd.f32 0.0, %v1264
  %v1266 = vpop.f32.mrb[0].mxu0
  %v1267 = vpop.f32.mrb[0].mxu0
  %v1268 = vadd.f32 0.0, %v1267
  %v1269 = vpop.f32.mrb[0].mxu0
  %1270 = vmatprep.mubr.bf16.mxu0 0
  %1271 = vmatmul.mubr.bf16.gmra.mrb[0].mxu0 %v1194
  %v1272 = vpop.f32.mrb[0].mxu0
  %v1273 = vadd.f32 0.0, %v1272
  %v1274 = vpop.f32.mrb[0].mxu0
  %v1275 = vpop.f32.mrb[0].mxu0
  %v1276 = vadd.f32 0.0, %v1275
  %v1277 = vpop.f32.mrb[0].mxu0
  %1278 = vmatprep.mubr.bf16.mxu0 0
  %1279 = vmatmul.mubr.bf16.gmra.mrb[0].mxu0 %v1195
  %v1280 = vpop.f32.mrb[0].mxu0
  %v1281 = vadd.f32 0.0, %v1280
  %v1282 = vpop.f32.mrb[0].mxu0
  %v1283 = vpop.f32.mrb[0].mxu0
  %v1284 = vadd.f32 0.0, %v1283
  %v1285 = vpop.f32.mrb[0].mxu0
  %1286 = vmatprep.mubr.bf16.mxu0 0
  %1287 = vmatmul.mubr.bf16.gmra.mrb[0].mxu0 %v1196
  %v1288 = vpop.f32.mrb[0].mxu0
  %v1289 = vadd.f32 0.0, %v1288
  %v1290 = vpop.f32.mrb[0].mxu0
  %v1291 = vpop.f32.mrb[0].mxu0
  %v1292 = vadd.f32 0.0, %v1291
  %v1293 = vpop.f32.mrb[0].mxu0
  %1294 = vmatprep.mubr.bf16.mxu0 0
  %1295 = vmatmul.mubr.bf16.gmra.mrb[0].mxu0 %v1197
  %v1296 = vpop.f32.mrb[0].mxu0
  %v1297 = vadd.f32 0.0, %v1296
  %v1298 = vpop.f32.mrb[0].mxu0
  %v1299 = vpop.f32.mrb[0].mxu0
  %v1300 = vadd.f32 0.0, %v1299
  %v1301 = vpop.f32.mrb[0].mxu0
  %1302 = vdwg.mxu0
  %v1303 = vld [vmem:[%s9] sm:$0xf]
  %v1304 = vld [vmem:[%s9 + $0x4] sm:$0xf]
  %v1305 = vld [vmem:[%s9 + $0x8] sm:$0xf]
  %v1306 = vld [vmem:[%s9 + $0xc] sm:$0xf]
  %v1307 = vld [vmem:[%s9 + $0x10] sm:$0xf]
  %v1308 = vld [vmem:[%s9 + $0x14] sm:$0xf]
  %v1309 = vld [vmem:[%s9 + $0x18] sm:$0xf]
  %v1310 = vld [vmem:[%s9 + $0x1c] sm:$0xf]
  %v1311 = vld [vmem:[%s9 + $0x20] sm:$0xf]
  %v1312 = vld [vmem:[%s9 + $0x24] sm:$0xf]
  %v1313 = vld [vmem:[%s9 + $0x28] sm:$0xf]
  %v1314 = vld [vmem:[%s9 + $0x2c] sm:$0xf]
  %v1315 = vld [vmem:[%s9 + $0x30] sm:$0xf]
  %v1316 = vld [vmem:[%s9 + $0x34] sm:$0xf]
  %v1317 = vld [vmem:[%s9 + $0x38] sm:$0xf]
  %v1318 = vld [vmem:[%s9 + $0x3c] sm:$0xf]
  %v1335 = vunpack.c.l.b16 %v1303
  %v1336 = vunpack.c.l.b16 %v1304
  %v1337 = vunpack.c.l.b16 %v1305
  %v1338 = vunpack.c.l.b16 %v1306
  %v1339 = vunpack.c.l.b16 %v1307
  %v1340 = vunpack.c.l.b16 %v1308
  %v1341 = vunpack.c.l.b16 %v1309
  %v1342 = vunpack.c.l.b16 %v1310
  %v1343 = vunpack.c.l.b16 %v1311
  %v1344 = vunpack.c.l.b16 %v1312
  %v1345 = vunpack.c.l.b16 %v1313
  %v1346 = vunpack.c.l.b16 %v1314
  %v1347 = vunpack.c.l.b16 %v1315
  %v1348 = vunpack.c.l.b16 %v1316
  %v1349 = vunpack.c.l.b16 %v1317
  %v1350 = vunpack.c.l.b16 %v1318
  %v1351 = vpack.c.b16 %v1336, %v1335
  %v1352 = vpack.c.b16 %v1338, %v1337
  %v1353 = vpack.c.b16 %v1340, %v1339
  %v1354 = vpack.c.b16 %v1342, %v1341
  %v1355 = vpack.c.b16 %v1344, %v1343
  %v1356 = vpack.c.b16 %v1346, %v1345
  %v1357 = vpack.c.b16 %v1348, %v1347
  %v1358 = vpack.c.b16 %v1350, %v1349
  %1367 = vmatprep.subr.bf16.mxu0 0
  %1368 = vmatpush1.bf16.msra.mxu0 %v1134
  %1369 = vmatprep.subr.bf16.mxu0 0
  %1370 = vmatpush1.bf16.msra.mxu0 %v1135
  %1371 = vmatprep.subr.bf16.mxu0 0
  %1372 = vmatpush1.bf16.msra.mxu0 %v1136
  %1373 = vmatprep.subr.bf16.mxu0 0
  %1374 = vmatpush1.bf16.msra.mxu0 %v1137
  %1375 = vmatprep.subr.bf16.mxu0 0
  %1376 = vmatpush1.bf16.msra.mxu0 %v1138
  %1377 = vmatprep.subr.bf16.mxu0 0
  %1378 = vmatpush1.bf16.msra.mxu0 %v1139
  %1379 = vmatprep.subr.bf16.mxu0 0
  %1380 = vmatpush1.bf16.msra.mxu0 %v1140
  %1381 = vmatprep.subr.bf16.mxu0 0
  %1382 = vmatpush1.bf16.msra.mxu0 %v1141
  %1383 = vmatprep.subr.bf16.mxu0 0
  %1384 = vmatpush1.bf16.msra.mxu0 0
  %1385 = vmatprep.subr.bf16.mxu0 0
  %1386 = vmatpush1.bf16.msra.mxu0 0
  %1387 = vmatprep.subr.bf16.mxu0 0
  %1388 = vmatpush1.bf16.msra.mxu0 0
  %1389 = vmatprep.subr.bf16.mxu0 0
  %1390 = vmatpush1.bf16.msra.mxu0 0
  %1391 = vmatprep.subr.bf16.mxu0 0
  %1392 = vmatpush1.bf16.msra.mxu0 0
  %1393 = vmatprep.subr.bf16.mxu0 0
  %1394 = vmatpush1.bf16.msra.mxu0 0
  %1395 = vmatprep.subr.bf16.mxu0 0
  %1396 = vmatpush1.bf16.msra.mxu0 0
  %1397 = vmatprep.subr.bf16.mxu0 0
  %1398 = vmatpush1.bf16.msra.mxu0 0
  %1399 = vmatprep.mubr.bf16.mxu0 0
  %1400 = vmatmul.mubr.bf16.gmra.mrb[0].mxu0 %v1351
  %v1401 = vpop.f32.mrb[0].mxu0
  %v1402 = vadd.f32 0.0, %v1401
  %v1403 = vpop.f32.mrb[0].mxu0
  %v1404 = vpop.f32.mrb[0].mxu0
  %v1405 = vadd.f32 0.0, %v1404
  %v1406 = vpop.f32.mrb[0].mxu0
  %1407 = vmatprep.mubr.bf16.mxu0 0
  %1408 = vmatmul.mubr.bf16.gmra.mrb[0].mxu0 %v1352
  %v1409 = vpop.f32.mrb[0].mxu0
  %v1410 = vadd.f32 0.0, %v1409
  %v1411 = vpop.f32.mrb[0].mxu0
  %v1412 = vpop.f32.mrb[0].mxu0
  %v1413 = vadd.f32 0.0, %v1412
  %v1414 = vpop.f32.mrb[0].mxu0
  %1415 = vmatprep.mubr.bf16.mxu0 0
  %1416 = vmatmul.mubr.bf16.gmra.mrb[0].mxu0 %v1353
  %v1417 = vpop.f32.mrb[0].mxu0
  %v1418 = vadd.f32 0.0, %v1417
  %v1419 = vpop.f32.mrb[0].mxu0
  %v1420 = vpop.f32.mrb[0].mxu0
  %v1421 = vadd.f32 0.0, %v1420
  %v1422 = vpop.f32.mrb[0].mxu0
  %1423 = vmatprep.mubr.bf16.mxu0 0
  %1424 = vmatmul.mubr.bf16.gmra.mrb[0].mxu0 %v1354
  %v1425 = vpop.f32.mrb[0].mxu0
  %v1426 = vadd.f32 0.0, %v1425
  %v1427 = vpop.f32.mrb[0].mxu0
  %v1428 = vpop.f32.mrb[0].mxu0
  %v1429 = vadd.f32 0.0, %v1428
  %v1430 = vpop.f32.mrb[0].mxu0
  %1431 = vmatprep.mubr.bf16.mxu0 0
  %1432 = vmatmul.mubr.bf16.gmra.mrb[0].mxu0 %v1355
  %v1433 = vpop.f32.mrb[0].mxu0
  %v1434 = vadd.f32 0.0, %v1433
  %v1435 = vpop.f32.mrb[0].mxu0
  %v1436 = vpop.f32.mrb[0].mxu0
  %v1437 = vadd.f32 0.0, %v1436
  %v1438 = vpop.f32.mrb[0].mxu0
  %1439 = vmatprep.mubr.bf16.mxu0 0
  %1440 = vmatmul.mubr.bf16.gmra.mrb[0].mxu0 %v1356
  %v1441 = vpop.f32.mrb[0].mxu0
  %v1442 = vadd.f32 0.0, %v1441
  %v1443 = vpop.f32.mrb[0].mxu0
  %v1444 = vpop.f32.mrb[0].mxu0
  %v1445 = vadd.f32 0.0, %v1444
  %v1446 = vpop.f32.mrb[0].mxu0
  %1447 = vmatprep.mubr.bf16.mxu0 0
  %1448 = vmatmul.mubr.bf16.gmra.mrb[0].mxu0 %v1357
  %v1449 = vpop.f32.mrb[0].mxu0
  %v1450 = vadd.f32 0.0, %v1449
  %v1451 = vpop.f32.mrb[0].mxu0
  %v1452 = vpop.f32.mrb[0].mxu0
  %v1453 = vadd.f32 0.0, %v1452
  %v1454 = vpop.f32.mrb[0].mxu0
  %1455 = vmatprep.mubr.bf16.mxu0 0
  %1456 = vmatmul.mubr.bf16.gmra.mrb[0].mxu0 %v1358
  %v1457 = vpop.f32.mrb[0].mxu0
  %v1458 = vadd.f32 0.0, %v1457
  %v1459 = vpop.f32.mrb[0].mxu0
  %v1460 = vpop.f32.mrb[0].mxu0
  %v1461 = vadd.f32 0.0, %v1460
  %v1462 = vpop.f32.mrb[0].mxu0
  %1463 = vdwg.mxu0
  %v1464 = vmul.f32 %v1241, %v1402
  %v1465 = vmul.f32 %v1244, %v1405
  %v1466 = vmul.f32 %v1249, %v1410
  %v1467 = vmul.f32 %v1252, %v1413
  %v1468 = vmul.f32 %v1257, %v1418
  %v1469 = vmul.f32 %v1260, %v1421
  %v1470 = vmul.f32 %v1265, %v1426
  %v1471 = vmul.f32 %v1268, %v1429
  %v1472 = vmul.f32 %v1273, %v1434
  %v1473 = vmul.f32 %v1276, %v1437
  %v1474 = vmul.f32 %v1281, %v1442
  %v1475 = vmul.f32 %v1284, %v1445
  %v1476 = vmul.f32 %v1289, %v1450
  %v1477 = vmul.f32 %v1292, %v1453
  %v1478 = vmul.f32 %v1297, %v1458
  %v1479 = vmul.f32 %v1300, %v1461
  %1480 = vxpose.xlu0.b32.start [1/16] %v1464, 128
  %1481 = vxpose.xlu0.b32.cont [2/16] %v1465, 128
  %1482 = vxpose.xlu0.b32.cont [3/16] %v1466, 128
  %1483 = vxpose.xlu0.b32.cont [4/16] %v1467, 128
  %1484 = vxpose.xlu0.b32.cont [5/16] %v1468, 128
  %1485 = vxpose.xlu0.b32.cont [6/16] %v1469, 128
  %1486 = vxpose.xlu0.b32.cont [7/16] %v1470, 128
  %1487 = vxpose.xlu0.b32.cont [8/16] %v1471, 128
  %1488 = vxpose.xlu0.b32.cont [9/16] %v1472, 128
  %1489 = vxpose.xlu0.b32.cont [10/16] %v1473, 128
  %1490 = vxpose.xlu0.b32.cont [11/16] %v1474, 128
  %1491 = vxpose.xlu0.b32.cont [12/16] %v1475, 128
  %1492 = vxpose.xlu0.b32.cont [13/16] %v1476, 128
  %1493 = vxpose.xlu0.b32.cont [14/16] %v1477, 128
  %1494 = vxpose.xlu0.b32.cont [15/16] %v1478, 128
  %1495 = vxpose.xlu0.b32.end [16/16] %v1479, 128
  %v1496 = vpop.trf.xlu0
  %v1497 = vpop.trf.xlu0
  %v1498 = vpop.trf.xlu0
  %v1499 = vpop.trf.xlu0
  %v1500 = vpop.trf.xlu0
  %v1501 = vpop.trf.xlu0
  %v1502 = vpop.trf.xlu0
  %v1503 = vpop.trf.xlu0
  %v1504 = vpop.trf.xlu0
  %v1505 = vpop.trf.xlu0
  %v1506 = vpop.trf.xlu0
  %v1507 = vpop.trf.xlu0
  %v1508 = vpop.trf.xlu0
  %v1509 = vpop.trf.xlu0
  %v1510 = vpop.trf.xlu0
  %v1511 = vpop.trf.xlu0
  %v1512 = vadd.f32 %v1496, %v1497
  %v1513 = vadd.f32 %v1512, %v1498
  %v1514 = vadd.f32 %v1513, %v1499
  %v1515 = vadd.f32 %v1514, %v1500
  %v1516 = vadd.f32 %v1515, %v1501
  %v1517 = vadd.f32 %v1516, %v1502
  %v1518 = vadd.f32 %v1517, %v1503
  %v1519 = vadd.f32 %v1518, %v1504
  %v1520 = vadd.f32 %v1519, %v1505
  %v1521 = vadd.f32 %v1520, %v1506
  %v1522 = vadd.f32 %v1521, %v1507
  %v1523 = vadd.f32 %v1522, %v1508
  %v1524 = vadd.f32 %v1523, %v1509
  %v1525 = vadd.f32 %v1524, %v1510
  %v1526 = vadd.f32 %v1525, %v1511
  %v1527 = vrot.slane %v1526, 4
  %v1528 = vadd.f32 %v1526, %v1527
  %v1529 = vrot.slane %v1528, 2
  %v1530 = vadd.f32 %v1528, %v1529
  %v1531 = vrot.slane %v1530, 1
  %v1532 = vadd.f32 %v1530, %v1531
  %1533 = vst [vmem:[%s10] sm:$0x1] %v1532
  // Predicated region
  $region42: #{model_forward.1} parent=0 // pred_check
    _
  $region43: #{model_forward.1} parent=0 // pred_check_branch
    %1535 = sbr.rel (0) target = $region45
  $region44: #{model_forward.1} parent=0 // pred_region
    _
  $region45: #{model_forward.1} parent=0 // pred_fallthru
    _
  // Predicated region
  $region46: #{model_forward.1} parent=0 // pred_check
    _
  $region47: #{model_forward.1} parent=0 // pred_check_branch
    %1537 = sbr.rel (0) target = $region49
  $region48: #{model_forward.1} parent=0 // pred_region
    _
  $region49: #{model_forward.1} parent=0 // pred_fallthru
    _

</llo_original>
